<compile_context>
chip_gen: v7x
topology: tpu7x:2x2x1
jax: 0.10.0
libtpu: 0.0.40
codegen_flags: <defaults>
</compile_context>

<pallas_src>
import functools
import math

import jax
import jax.numpy as jnp
from jax.experimental import pallas as pl
from jax.experimental.pallas import tpu as pltpu


def _rescale_kernel(x_ref, o_ref):
    # elementwise: y = 2*x - 1   (VPU)
    o_ref[...] = x_ref[...] * 2.0 - 1.0


_LANE = 128                   # minimum lane width (vreg lane count)
_MAX_TILE_BYTES = 4 << 20     # ~4 MiB/buffer; x2 (in+out) x2 (double-buffer) = 16 MiB
_VMEM_LIMIT_BYTES = 32 << 20  # explicit scoped-VMEM limit, safe on v5e/v6e/v7x
_SPLIT_BYTES = 1 << 20        # above ~1 MiB, ensure >= 2 grid steps (v7x megacore)
_PALLAS_MIN_BYTES = 1 << 20   # below ~1 MiB, launch overhead dwarfs the work


def _pallas_rescale_flat(img: jax.Array) -> jax.Array:
    """Flatten lane-dense -> tiled Pallas rescale (ragged last block) -> reshape."""
    orig_shape = img.shape
    dtype = img.dtype
    itemsize = jnp.dtype(dtype).itemsize
    total = math.prod(orig_shape)

    # Pad only to the next 128-element multiple (usually a no-op for images).
    padded_total = pl.cdiv(total, _LANE) * _LANE
    needs_pad = padded_total != total

    # Widen the lane dimension when divisibility allows (minor DMA win).
    lanes = _LANE
    for cand in (1024, 512, 256):
        if padded_total % cand == 0:
            lanes = cand
            break
    rows = padded_total // lanes

    flat = img.reshape(-1)
    if needs_pad:
        flat = jnp.pad(flat, (0, padded_total - total))
    x2d = flat.reshape(rows, lanes)

    # Tile rows: ~4 MiB per buffer, sublane-aligned for the dtype.
    row_align = max(8, 32 // itemsize)                 # f32:8, bf16:16, int8:32
    tile_rows = max(row_align, _MAX_TILE_BYTES // (lanes * itemsize))
    tile_rows = (tile_rows // row_align) * row_align
    # Keep >= 2 grid steps for HBM-significant sizes so the "parallel" grid can
    # split across both v7x TensorCores.
    if total * itemsize >= _SPLIT_BYTES:
        half_rows = pl.cdiv(pl.cdiv(rows, 2), row_align) * row_align
        tile_rows = min(tile_rows, half_rows)
    if tile_rows >= rows:
        tile_rows = rows                               # single full-extent block
    grid_steps = pl.cdiv(rows, tile_rows)              # ragged last block is OK
                                                       # (OOB writes are dropped)

    out2d = pl.pallas_call(
        _rescale_kernel,
        out_shape=jax.ShapeDtypeStruct((rows, lanes), dtype),
        grid=(grid_steps,),
        in_specs=[pl.BlockSpec((tile_rows, lanes), lambda i: (i, 0))],
        out_specs=pl.BlockSpec((tile_rows, lanes), lambda i: (i, 0)),
        # Only alias when jnp.pad produced a fresh intermediate buffer; never
        # alias a plain reshape of the caller's (non-donated) input.
        input_output_aliases={0: 0} if needs_pad else {},
        compiler_params=pltpu.CompilerParams(
            dimension_semantics=("parallel",),         # megacore-sharded on v7x
            vmem_limit_bytes=_VMEM_LIMIT_BYTES,
        ),
    )(x2d)

    out = out2d.reshape(-1)
    if needs_pad:
        out = out[:total]
    return out.reshape(orig_shape)


@functools.partial(jax.jit, static_argnames=("force_pallas",))
def rescale_to_pm1(img: jax.Array, *, force_pallas: bool = False) -> jax.Array:
    """img in [0,1], NCHW -> 2*img - 1 (Pallas kernel for HBM-significant sizes)."""
    assert img.ndim == 4, "img must be of shape (B, C, H, W)"
    nbytes = math.prod(img.shape) * jnp.dtype(img.dtype).itemsize
    if force_pallas or nbytes >= _PALLAS_MIN_BYTES:
        return _pallas_rescale_flat(img)
    # Tiny-image fast path: a pallas_call has fixed launch/pipeline cost that
    # dwarfs a few KiB of VPU work; let XLA fuse the elementwise op instead.
    return img * 2.0 - 1.0


class ImagePrompt:
    """JAX/Pallas port of maua.prompt.ImagePrompt.

    Takes an image tensor in [0, 1] of shape (B, C, H, W), stores the rescaled
    buffer 2*img - 1, and forward() returns (img, weight).
    """

    def __init__(self, img: jax.Array, weight: float = 1.0,
                 force_pallas: bool = False):
        assert img.ndim == 4, "img must be of shape (B, C, H, W)"
        self.weight = weight
        # equivalent of register_buffer('img', img.mul(2).sub(1))
        # TODO(synk): PIL/path loading (Image.open/fetch/to_tensor) and
        # `resample(img, min(size))` Lanczos resize are not ported; only the
        # tensor + size=None path is implemented.
        self.img = rescale_to_pm1(img, force_pallas=force_pallas)

    def forward(self):
        return (self.img, self.weight)

    __call__ = forward


if __name__ == "__main__":
    key = jax.random.PRNGKey(0)
    # Synthetic "to_tensor" output: RGB image batch in [0, 1], NCHW.
    B, C, H, W = 2, 3, 16, 16
    x = jax.random.uniform(key, (B, C, H, W), dtype=jnp.float32)

    # Force the Pallas path so the kernel executes even for this tiny demo
    # (production-sized images take this path automatically via the byte
    # threshold).
    prompt = ImagePrompt(x, weight=1.0, force_pallas=True)
    img_out, weight = prompt()
    img_out = jax.block_until_ready(img_out)

    # sanity check against pure-JAX reference
    ref = x * 2.0 - 1.0
    assert img_out.shape == (B, C, H, W)
    assert jnp.allclose(img_out, ref, atol=1e-6), "mismatch vs reference"
    assert weight == 1.0

    print("KERNEL_OK")
</pallas_src>

<mosaic_0001>
module attributes {stable_mosaic.version = 11 : i64} {
  func.func @_rescale_kernel(%arg0: i32, %arg1: memref<3x512xf32, #tpu.memory_space<vmem>>, %arg2: memref<3x512xf32, #tpu.memory_space<vmem>>) attributes {dimension_semantics = [#tpu.dimension_semantics<parallel>], iteration_bounds = array<i64: 1>, scalar_prefetch = 0 : i64, scratch_operands = 0 : i64, tpu.core_type = #tpu.core_type<tc>, window_params = [{transform_indices = @transform_0, window_bounds = array<i64: 3, 512>}, {transform_indices = @transform_1, window_bounds = array<i64: 3, 512>}]} {
    %c0 = arith.constant 0 : index
    %c0_0 = arith.constant 0 : index
    %0 = vector.load %arg1[%c0, %c0_0] : memref<3x512xf32, #tpu.memory_space<vmem>>, vector<3x512xf32>
    %cst = arith.constant 2.000000e+00 : f32
    %1 = vector.broadcast %cst : f32 to vector<3x512xf32>
    %2 = arith.mulf %0, %1 : vector<3x512xf32>
    %cst_1 = arith.constant 1.000000e+00 : f32
    %3 = vector.broadcast %cst_1 : f32 to vector<3x512xf32>
    %4 = arith.subf %2, %3 : vector<3x512xf32>
    %c0_2 = arith.constant 0 : index
    %c0_3 = arith.constant 0 : index
    %5 = vector.load %arg2[%c0_2, %c0_3] : memref<3x512xf32, #tpu.memory_space<vmem>>, vector<3x512xf32>
    tpu.vector_store %arg2[%c0_2, %c0_3], %4 {strides = array<i32>} : memref<3x512xf32, #tpu.memory_space<vmem>>, vector<3x512xf32>,
    return
  }
  func.func @transform_0(%arg0: i32) -> (i32, i32) {
    %c0_i32 = arith.constant 0 : i32
    %c0_i32_0 = arith.constant 0 : i32
    return %arg0, %c0_i32 : i32, i32
  }
  func.func @transform_1(%arg0: i32) -> (i32, i32) {
    %c0_i32 = arith.constant 0 : i32
    %c0_i32_0 = arith.constant 0 : i32
    return %arg0, %c0_i32 : i32, i32
  }
}

</mosaic_0001>

<llo_original>
// kernel: rescale_to_pm1.1
$region0: #{rescale_to_pm1.1}
  #allocation0 [shape = 'u32[]', space=smem, size = 0x4, offset = 0x4, fixed_abs, tag = 'smem constant byte address 0x4 - core index']
  #allocation1 [shape = 'u32[144,128]{1,0:T(1,128)}', space=vmem, size = 0x12000, scoped, tag = 'internal scratch']
  %s0 = inlined_call_operand.vmem [shape: f32[3,512], index: 0, kind: input, shape index: {}]
  %s1 = inlined_call_operand.vmem [shape: f32[3,512], index: 1, kind: output, shape index: {}]
  %s2 = sld [smem:[#allocation0]]
  $region14: #{rescale_to_pm1.1} parent=0
    _
  %s4 = ssub.s32 1, %s2
  %s5 = scalar_select 0, %s4, %s2
  // Predicated region
  $region2: #{rescale_to_pm1.1} parent=0 // pred_check
    _
  $region3: #{rescale_to_pm1.1} parent=0 // pred_check_branch
    %7 = sbr.rel (0) target = $region5
  $region4: #{rescale_to_pm1.1} parent=0 // pred_region
    _
  $region5: #{rescale_to_pm1.1} parent=0 // pred_fallthru
    _
  %v8 = vld [vmem:[%s0] sm:$0x77]
  %v9 = vld [vmem:[%s0 + $0x8] sm:$0x77]
  %v10 = vmul.f32 %v8, 2.0
  %v11 = vmul.f32 %v9, 2.0
  %v12 = vsub.f32 %v10, 1.0
  %v13 = vsub.f32 %v11, 1.0
  %14 = vst [vmem:[%s1] sm:$0x77] %v12
  %15 = vst [vmem:[%s1 + $0x8] sm:$0x77] %v13
  // Predicated region
  $region6: #{rescale_to_pm1.1} parent=0 // pred_check
    _
  $region7: #{rescale_to_pm1.1} parent=0 // pred_check_branch
    %17 = sbr.rel (0) target = $region9
  $region8: #{rescale_to_pm1.1} parent=0 // pred_region
    _
  $region9: #{rescale_to_pm1.1} parent=0 // pred_fallthru
    _
  // Predicated region
  $region10: #{rescale_to_pm1.1} parent=0 // pred_check
    _
  $region11: #{rescale_to_pm1.1} parent=0 // pred_check_branch
    %19 = sbr.rel (0) target = $region13
  $region12: #{rescale_to_pm1.1} parent=0 // pred_region
    _
  $region13: #{rescale_to_pm1.1} parent=0 // pred_fallthru
    _

</llo_original>
